<compile_context>
chip_gen: v5e
topology: v5e:2x2
jax: 0.10.0
libtpu: 0.0.40
codegen_flags: <defaults>
</compile_context>

<pallas_src>
import functools
import math

import jax
import jax.numpy as jnp
from jax.experimental import pallas as pl
from jax.experimental.pallas import tpu as pltpu


def _resmlp_kernel(*refs, eps: float, folded: bool):
    if folded:
        (x_ref, w1_ref, b1_ref, w2_ref, b2_ref, g_ref, beta_ref,
         p_ref, q_ref, o_ref) = refs
    else:
        x_ref, w1_ref, b1_ref, w2_ref, b2_ref, g_ref, beta_ref, o_ref = refs

    # One lane-dense row tile of (folded) tokens: (TM, FD)
    x = x_ref[...]

    # Linear(dim, dim//2) + ReLU (block-diagonal weights => per-token matmul), f32 accum.
    h = jnp.dot(x, w1_ref[...], preferred_element_type=jnp.float32)
    h = jnp.maximum(h + b1_ref[...].astype(jnp.float32), 0.0)
    # Keep the second matmul's operands in the weight dtype (fast MXU path for bf16).
    h = h.astype(w2_ref.dtype)

    # Linear(dim//2, dim)
    y = jnp.dot(h, w2_ref[...], preferred_element_type=jnp.float32)
    y = y + b2_ref[...].astype(jnp.float32)

    # LayerNorm statistics (biased variance, PyTorch eps placement).
    if folded:
        # Per-token (per D-lane segment) stats via factored block-diagonal averaging:
        # (TM,FD)@(FD,F) -> per-segment mean, then @(F,FD) broadcasts it back to lanes.
        mean = jnp.dot(jnp.dot(y, p_ref[...], preferred_element_type=jnp.float32),
                       q_ref[...], preferred_element_type=jnp.float32)
        yc = y - mean
        var = jnp.dot(jnp.dot(yc * yc, p_ref[...], preferred_element_type=jnp.float32),
                      q_ref[...], preferred_element_type=jnp.float32)
    else:
        mean = jnp.mean(y, axis=-1, keepdims=True)
        yc = y - mean
        var = jnp.mean(yc * yc, axis=-1, keepdims=True)

    inv = jax.lax.rsqrt(var + eps)
    ln = yc * inv * g_ref[...].astype(jnp.float32) + beta_ref[...].astype(jnp.float32)

    # Residual add in f32; single cast on store.
    o_ref[...] = (x.astype(jnp.float32) + ln).astype(o_ref.dtype)


def _round_up(a: int, b: int) -> int:
    return ((a + b - 1) // b) * b


def _chip_info():
    """(tensorcores_per_chip, vmem_capacity_bytes) with safe fallbacks."""
    n_tc, vmem_cap = 1, 128 << 20
    try:
        kind = jax.devices()[0].device_kind.lower()
    except Exception:
        kind = ""
    if "v7" in kind or "7x" in kind:
        n_tc, vmem_cap = 2, 64 << 20
    try:
        vmem_cap = int(pltpu.get_tpu_info().vmem_capacity_bytes)
    except Exception:
        pass
    return n_tc, vmem_cap


def _sublane_multiple(dtype) -> int:
    # f32 -> 8, bf16/f16 -> 16, int8/fp8 -> 32 (native packed-sublane tiles).
    return max(8, 32 // jnp.dtype(dtype).itemsize)


def resmlp_forward(x, w1, b1, w2, b2, gamma, beta, *, eps=1e-5, max_block_rows=1024):
    """x: (..., D). Returns x + LayerNorm(Linear2(ReLU(Linear1(x))))."""
    orig_shape = x.shape
    D = orig_shape[-1]
    H = w1.shape[1]
    xf = x.reshape(-1, D)
    N = xf.shape[0]

    # Lane-folding factor: pack F tokens per lane-dense row (FD is a multiple of 128).
    if D < 128:
        F = math.lcm(D, 128) // D
        if F * D > 512:
            # TODO(synk): awkward small D (e.g. 100) falls back to F=1 / masked stores.
            F = 1
    else:
        F = 1
    FD, FH = F * D, F * H
    folded = F > 1

    # Pad only to a multiple of F (< F tokens); row tiling uses cdiv + edge-block masking.
    n_tok = _round_up(N, F)
    if n_tok != N:
        xf = jnp.pad(xf, ((0, n_tok - N), (0, 0)))
    nf = n_tok // F
    xfold = xf.reshape(nf, FD)

    # Block-diagonal / lane-tiled parameters, built once in the wrapper.
    if folded:
        eyeF = jnp.eye(F, dtype=w1.dtype)
        w1_k = jnp.kron(eyeF, w1)                                      # (FD, FH)
        w2_k = jnp.kron(eyeF, w2)                                      # (FH, FD)
        p_k = jnp.kron(jnp.eye(F, dtype=jnp.float32),
                       jnp.full((D, 1), 1.0 / D, dtype=jnp.float32))   # (FD, F)
        q_k = jnp.kron(jnp.eye(F, dtype=jnp.float32),
                       jnp.ones((1, D), dtype=jnp.float32))            # (F, FD)
    else:
        w1_k, w2_k = w1, w2
    b1_k = jnp.tile(b1, F).reshape(1, FH)
    b2_k = jnp.tile(b2, F).reshape(1, FD)
    g_k = jnp.tile(gamma, F).reshape(1, FD)
    bt_k = jnp.tile(beta, F).reshape(1, FD)

    # ---- Chip/dtype-aware tile size and VMEM budget ----
    n_tc, vmem_cap = _chip_info()
    x_item = jnp.dtype(x.dtype).itemsize
    w_item = jnp.dtype(w1.dtype).itemsize
    sub = _sublane_multiple(x.dtype)

    # Resident parameter bytes (budget conservatively as if double-buffered).
    param_bytes = 2 * FD * FH * w_item * 2 + 8 * FD * 4
    if folded:
        param_bytes += 2 * FD * F * 4 * 2
    # Per folded-row bytes: double-buffered in+out tiles + f32 intermediates.
    per_row = 4 * FD * x_item + 24 * FD

    budget = min(vmem_cap // 2, 48 << 20)
    br = (budget - param_bytes) // per_row
    br = max(sub, min(br, max_block_rows))
    if br >= nf:
        br = nf                                   # single full-extent block
    else:
        br = max(sub, (br // sub) * sub)          # sublane-tile multiple when partial
        if br >= nf:
            br = nf
    # Only on multi-TensorCore chips (v7x) force >= 2 row blocks so both TCs get work.
    if n_tc >= 2 and br == nf and nf >= 2 * sub:
        br = _round_up((nf + 1) // 2, sub)
        if br >= nf:
            br = nf

    grid = (pl.cdiv(nf, br),)
    est_bytes = param_bytes + br * per_row + (2 << 20)
    vmem_limit = int(min(vmem_cap * 7 // 8, max(est_bytes * 3 // 2, 32 << 20)))

    big_weights = FD * FH * w_item * 2 > (1 << 20)
    const = lambda i: (0, 0)

    def run(weight_mode):
        wkw = {} if weight_mode is None else {"pipeline_mode": weight_mode}
        in_specs = [
            pl.BlockSpec((br, FD), lambda i: (i, 0)),        # x tile (lane-dense)
            pl.BlockSpec((FD, FH), const, **wkw),            # W1 (block-diag)
            pl.BlockSpec((1, FH), const),                    # b1 (lane-tiled)
            pl.BlockSpec((FH, FD), const, **wkw),            # W2 (block-diag)
            pl.BlockSpec((1, FD), const),                    # b2
            pl.BlockSpec((1, FD), const),                    # gamma
            pl.BlockSpec((1, FD), const),                    # beta
        ]
        args = [xfold, w1_k, b1_k, w2_k, b2_k, g_k, bt_k]
        if folded:
            in_specs += [pl.BlockSpec((FD, F), const),       # P: per-segment averaging
                         pl.BlockSpec((F, FD), const)]       # Q: broadcast back to lanes
            args += [p_k, q_k]
        return pl.pallas_call(
            functools.partial(_resmlp_kernel, eps=eps, folded=folded),
            out_shape=jax.ShapeDtypeStruct((nf, FD), x.dtype),
            grid_spec=pltpu.PrefetchScalarGridSpec(
                num_scalar_prefetch=0,
                grid=grid,
                in_specs=in_specs,
                out_specs=pl.BlockSpec((br, FD), lambda i: (i, 0)),
            ),
            compiler_params=pltpu.CompilerParams(
                dimension_semantics=("parallel",),   # row blocks shard across v7x's 2 TCs
                vmem_limit_bytes=vmem_limit),
        )(*args)

    if big_weights and hasattr(pl, "Buffered"):
        try:
            out = run(pl.Buffered(1))      # constant-index weights: single buffer
        except Exception:
            out = run(None)                # fallback to default pipelining
    else:
        out = run(None)

    out_tok = out.reshape(n_tok, D)
    if n_tok != N:
        out_tok = out_tok[:N]
    return out_tok.reshape(orig_shape)


def resmlp_reference(x, w1, b1, w2, b2, gamma, beta, eps=1e-5):
    h = jnp.maximum(x @ w1 + b1, 0.0)
    y = h @ w2 + b2
    mean = jnp.mean(y, axis=-1, keepdims=True)
    var = jnp.mean((y - mean) ** 2, axis=-1, keepdims=True)
    ln = (y - mean) / jnp.sqrt(var + eps) * gamma + beta
    return x + ln


if __name__ == "__main__":
    key = jax.random.PRNGKey(0)

    def make_params(k, dim):
        bn = dim // 2
        k1, k2, k3, k4 = jax.random.split(k, 4)
        w1 = jax.random.normal(k1, (dim, bn), jnp.float32) * (1.0 / jnp.sqrt(dim))
        b1 = jax.random.normal(k2, (bn,), jnp.float32) * 0.01
        w2 = jax.random.normal(k3, (bn, dim), jnp.float32) * (1.0 / jnp.sqrt(bn))
        b2 = jax.random.normal(k4, (dim,), jnp.float32) * 0.01
        gamma = jnp.ones((dim,), jnp.float32)
        beta = jnp.zeros((dim,), jnp.float32)
        return w1, b1, w2, b2, gamma, beta

    kp1, kx1, kx2, kp2, kx3 = jax.random.split(key, 5)

    # Case 1: small folded path (dim=32 -> F=4, lane-dense), tokens = batch*seq = 16.
    dim = 32
    params = make_params(kp1, dim)
    x = jax.random.normal(kx1, (2, 8, dim), jnp.float32)
    out = jax.block_until_ready(resmlp_forward(x, *params))
    ref = resmlp_reference(x, *params)
    assert out.shape == x.shape
    assert jnp.allclose(out, ref, atol=1e-4, rtol=1e-4), "mismatch (folded, aligned)"

    # Case 2: token count not a multiple of the fold factor (small pad + edge masking).
    x2 = jax.random.normal(kx2, (3, 33, dim), jnp.float32)     # 99 tokens, F=4
    out2 = jax.block_until_ready(resmlp_forward(x2, *params))
    ref2 = resmlp_reference(x2, *params)
    assert out2.shape == x2.shape
    assert jnp.allclose(out2, ref2, atol=1e-4, rtol=1e-4), "mismatch (folded, ragged)"

    # Case 3: D >= 128 -> unfolded path with XLU lane-reduction LayerNorm stats.
    dim3 = 128
    params3 = make_params(kp2, dim3)
    x3 = jax.random.normal(kx3, (2, 8, dim3), jnp.float32)
    out3 = jax.block_until_ready(resmlp_forward(x3, *params3))
    ref3 = resmlp_reference(x3, *params3)
    assert out3.shape == x3.shape
    assert jnp.allclose(out3, ref3, atol=1e-4, rtol=1e-4), "mismatch (unfolded)"

    print("KERNEL_OK")
</pallas_src>

<mosaic_0001>
module attributes {stable_mosaic.version = 11 : i64} {
  func.func @_resmlp_kernel(%arg0: i32, %arg1: memref<4x128xf32, #tpu.memory_space<vmem>>, %arg2: memref<128x64xf32, #tpu.memory_space<vmem>>, %arg3: memref<1x64xf32, #tpu.memory_space<vmem>>, %arg4: memref<64x128xf32, #tpu.memory_space<vmem>>, %arg5: memref<1x128xf32, #tpu.memory_space<vmem>>, %arg6: memref<1x128xf32, #tpu.memory_space<vmem>>, %arg7: memref<1x128xf32, #tpu.memory_space<vmem>>, %arg8: memref<128x4xf32, #tpu.memory_space<vmem>>, %arg9: memref<4x128xf32, #tpu.memory_space<vmem>>, %arg10: memref<4x128xf32, #tpu.memory_space<vmem>>) attributes {dimension_semantics = [#tpu.dimension_semantics<parallel>], iteration_bounds = array<i64: 1>, scalar_prefetch = 0 : i64, scratch_operands = 0 : i64, tpu.core_type = #tpu.core_type<tc>, window_params = [{transform_indices = @transform_0, window_bounds = array<i64: 4, 128>}, {pipeline_mode = #tpu.pipeline_mode<synchronous>, transform_indices = @transform_1, window_bounds = array<i64: 128, 64>}, {pipeline_mode = #tpu.pipeline_mode<synchronous>, transform_indices = @transform_2, window_bounds = array<i64: 1, 64>}, {pipeline_mode = #tpu.pipeline_mode<synchronous>, transform_indices = @transform_3, window_bounds = array<i64: 64, 128>}, {pipeline_mode = #tpu.pipeline_mode<synchronous>, transform_indices = @transform_4, window_bounds = array<i64: 1, 128>}, {pipeline_mode = #tpu.pipeline_mode<synchronous>, transform_indices = @transform_5, window_bounds = array<i64: 1, 128>}, {pipeline_mode = #tpu.pipeline_mode<synchronous>, transform_indices = @transform_6, window_bounds = array<i64: 1, 128>}, {pipeline_mode = #tpu.pipeline_mode<synchronous>, transform_indices = @transform_7, window_bounds = array<i64: 128, 4>}, {pipeline_mode = #tpu.pipeline_mode<synchronous>, transform_indices = @transform_8, window_bounds = array<i64: 4, 128>}, {transform_indices = @transform_9, window_bounds = array<i64: 4, 128>}]} {
    %c0 = arith.constant 0 : index
    %c0_0 = arith.constant 0 : index
    %0 = vector.load %arg1[%c0, %c0_0] : memref<4x128xf32, #tpu.memory_space<vmem>>, vector<4x128xf32>
    %c0_1 = arith.constant 0 : index
    %c0_2 = arith.constant 0 : index
    %1 = vector.load %arg2[%c0_1, %c0_2] : memref<128x64xf32, #tpu.memory_space<vmem>>, vector<128x64xf32>
    %cst = arith.constant dense<0.000000e+00> : vector<4x64xf32>
    %2 = tpu.matmul %0, %1, %cst {dimension_numbers = #tpu.dot_dimension_numbers<[1], [0], [0], [1], [0, 0, 1, 1], [], []>} : vector<4x128xf32>, vector<128x64xf32>, vector<4x64xf32> -> vector<4x64xf32>
    %c0_3 = arith.constant 0 : index
    %c0_4 = arith.constant 0 : index
    %3 = vector.load %arg3[%c0_3, %c0_4] : memref<1x64xf32, #tpu.memory_space<vmem>>, vector<1x64xf32>
    %4 = vector.broadcast %3 : vector<1x64xf32> to vector<4x64xf32>
    %5 = arith.addf %2, %4 : vector<4x64xf32>
    %cst_5 = arith.constant 0.000000e+00 : f32
    %6 = vector.broadcast %cst_5 : f32 to vector<4x64xf32>
    %7 = arith.maximumf %5, %6 : vector<4x64xf32>
    %c0_6 = arith.constant 0 : index
    %c0_7 = arith.constant 0 : index
    %8 = vector.load %arg4[%c0_6, %c0_7] : memref<64x128xf32, #tpu.memory_space<vmem>>, vector<64x128xf32>
    %cst_8 = arith.constant dense<0.000000e+00> : vector<4x128xf32>
    %9 = tpu.matmul %7, %8, %cst_8 {dimension_numbers = #tpu.dot_dimension_numbers<[1], [0], [0], [1], [0, 0, 1, 1], [], []>} : vector<4x64xf32>, vector<64x128xf32>, vector<4x128xf32> -> vector<4x128xf32>
    %c0_9 = arith.constant 0 : index
    %c0_10 = arith.constant 0 : index
    %10 = vector.load %arg5[%c0_9, %c0_10] : memref<1x128xf32, #tpu.memory_space<vmem>>, vector<1x128xf32>
    %11 = vector.broadcast %10 : vector<1x128xf32> to vector<4x128xf32>
    %12 = arith.addf %9, %11 : vector<4x128xf32>
    %c0_11 = arith.constant 0 : index
    %c0_12 = arith.constant 0 : index
    %13 = vector.load %arg8[%c0_11, %c0_12] : memref<128x4xf32, #tpu.memory_space<vmem>>, vector<128x4xf32>
    %cst_13 = arith.constant dense<0.000000e+00> : vector<4x4xf32>
    %14 = tpu.matmul %12, %13, %cst_13 {dimension_numbers = #tpu.dot_dimension_numbers<[1], [0], [0], [1], [0, 0, 1, 1], [], []>} : vector<4x128xf32>, vector<128x4xf32>, vector<4x4xf32> -> vector<4x4xf32>
    %c0_14 = arith.constant 0 : index
    %c0_15 = arith.constant 0 : index
    %15 = vector.load %arg9[%c0_14, %c0_15] : memref<4x128xf32, #tpu.memory_space<vmem>>, vector<4x128xf32>
    %cst_16 = arith.constant dense<0.000000e+00> : vector<4x128xf32>
    %16 = tpu.matmul %14, %15, %cst_16 {dimension_numbers = #tpu.dot_dimension_numbers<[1], [0], [0], [1], [0, 0, 1, 1], [], []>} : vector<4x4xf32>, vector<4x128xf32>, vector<4x128xf32> -> vector<4x128xf32>
    %17 = arith.subf %12, %16 : vector<4x128xf32>
    %18 = arith.mulf %17, %17 : vector<4x128xf32>
    %c0_17 = arith.constant 0 : index
    %c0_18 = arith.constant 0 : index
    %19 = vector.load %arg8[%c0_17, %c0_18] : memref<128x4xf32, #tpu.memory_space<vmem>>, vector<128x4xf32>
    %cst_19 = arith.constant dense<0.000000e+00> : vector<4x4xf32>
    %20 = tpu.matmul %18, %19, %cst_19 {dimension_numbers = #tpu.dot_dimension_numbers<[1], [0], [0], [1], [0, 0, 1, 1], [], []>} : vector<4x128xf32>, vector<128x4xf32>, vector<4x4xf32> -> vector<4x4xf32>
    %c0_20 = arith.constant 0 : index
    %c0_21 = arith.constant 0 : index
    %21 = vector.load %arg9[%c0_20, %c0_21] : memref<4x128xf32, #tpu.memory_space<vmem>>, vector<4x128xf32>
    %cst_22 = arith.constant dense<0.000000e+00> : vector<4x128xf32>
    %22 = tpu.matmul %20, %21, %cst_22 {dimension_numbers = #tpu.dot_dimension_numbers<[1], [0], [0], [1], [0, 0, 1, 1], [], []>} : vector<4x4xf32>, vector<4x128xf32>, vector<4x128xf32> -> vector<4x128xf32>
    %cst_23 = arith.constant 9.99999974E-6 : f32
    %23 = vector.broadcast %cst_23 : f32 to vector<4x128xf32>
    %24 = arith.addf %22, %23 : vector<4x128xf32>
    %25 = math.rsqrt %24 : vector<4x128xf32>
    %26 = arith.mulf %17, %25 : vector<4x128xf32>
    %c0_24 = arith.constant 0 : index
    %c0_25 = arith.constant 0 : index
    %27 = vector.load %arg6[%c0_24, %c0_25] : memref<1x128xf32, #tpu.memory_space<vmem>>, vector<1x128xf32>
    %28 = vector.broadcast %27 : vector<1x128xf32> to vector<4x128xf32>
    %29 = arith.mulf %26, %28 : vector<4x128xf32>
    %c0_26 = arith.constant 0 : index
    %c0_27 = arith.constant 0 : index
    %30 = vector.load %arg7[%c0_26, %c0_27] : memref<1x128xf32, #tpu.memory_space<vmem>>, vector<1x128xf32>
    %31 = vector.broadcast %30 : vector<1x128xf32> to vector<4x128xf32>
    %32 = arith.addf %29, %31 : vector<4x128xf32>
    %33 = arith.addf %0, %32 : vector<4x128xf32>
    %c0_28 = arith.constant 0 : index
    %c0_29 = arith.constant 0 : index
    %34 = vector.load %arg10[%c0_28, %c0_29] : memref<4x128xf32, #tpu.memory_space<vmem>>, vector<4x128xf32>
    tpu.vector_store %arg10[%c0_28, %c0_29], %33 {strides = array<i32>} : memref<4x128xf32, #tpu.memory_space<vmem>>, vector<4x128xf32>,
    return
  }
  func.func @transform_0(%arg0: i32) -> (i32, i32) {
    %c0_i32 = arith.constant 0 : i32
    %c0_i32_0 = arith.constant 0 : i32
    return %arg0, %c0_i32 : i32, i32
  }
  func.func @transform_1(%arg0: i32) -> (i32, i32) {
    %c0_i32 = arith.constant 0 : i32
    %c0_i32_0 = arith.constant 0 : i32
    %c0_i32_1 = arith.constant 0 : i32
    return %c0_i32, %c0_i32_0 : i32, i32
  }
  func.func @transform_2(%arg0: i32) -> (i32, i32) {
    %c0_i32 = arith.constant 0 : i32
    %c0_i32_0 = arith.constant 0 : i32
    %c0_i32_1 = arith.constant 0 : i32
    return %c0_i32, %c0_i32_0 : i32, i32
  }
  func.func @transform_3(%arg0: i32) -> (i32, i32) {
    %c0_i32 = arith.constant 0 : i32
    %c0_i32_0 = arith.constant 0 : i32
    %c0_i32_1 = arith.constant 0 : i32
    return %c0_i32, %c0_i32_0 : i32, i32
  }
  func.func @transform_4(%arg0: i32) -> (i32, i32) {
    %c0_i32 = arith.constant 0 : i32
    %c0_i32_0 = arith.constant 0 : i32
    %c0_i32_1 = arith.constant 0 : i32
    return %c0_i32, %c0_i32_0 : i32, i32
  }
  func.func @transform_5(%arg0: i32) -> (i32, i32) {
    %c0_i32 = arith.constant 0 : i32
    %c0_i32_0 = arith.constant 0 : i32
    %c0_i32_1 = arith.constant 0 : i32
    return %c0_i32, %c0_i32_0 : i32, i32
  }
  func.func @transform_6(%arg0: i32) -> (i32, i32) {
    %c0_i32 = arith.constant 0 : i32
    %c0_i32_0 = arith.constant 0 : i32
    %c0_i32_1 = arith.constant 0 : i32
    return %c0_i32, %c0_i32_0 : i32, i32
  }
  func.func @transform_7(%arg0: i32) -> (i32, i32) {
    %c0_i32 = arith.constant 0 : i32
    %c0_i32_0 = arith.constant 0 : i32
    %c0_i32_1 = arith.constant 0 : i32
    return %c0_i32, %c0_i32_0 : i32, i32
  }
  func.func @transform_8(%arg0: i32) -> (i32, i32) {
    %c0_i32 = arith.constant 0 : i32
    %c0_i32_0 = arith.constant 0 : i32
    %c0_i32_1 = arith.constant 0 : i32
    return %c0_i32, %c0_i32_0 : i32, i32
  }
  func.func @transform_9(%arg0: i32) -> (i32, i32) {
    %c0_i32 = arith.constant 0 : i32
    %c0_i32_0 = arith.constant 0 : i32
    return %arg0, %c0_i32 : i32, i32
  }
}

</mosaic_0001>

<llo_original>
// kernel: tpu_custom_call.1
$region0: #{tpu_custom_call.1}
  #allocation0 [shape = 'u32[]', space=smem, size = 0x4, offset = 0x4, fixed_abs, tag = 'smem constant byte address 0x4 - core index']
  #allocation1 [shape = 'u32[72,128]{1,0:T(1,128)}', space=vmem, size = 0x9000, scoped, tag = 'internal scratch']
  %s0 = inlined_call_operand.vmem [shape: f32[4,128], index: 0, kind: input, shape index: {}]
  %s1 = inlined_call_operand.vmem [shape: f32[128,64], index: 1, kind: input, shape index: {}]
  %s2 = inlined_call_operand.vmem [shape: f32[1,64], index: 2, kind: input, shape index: {}]
  %s3 = inlined_call_operand.vmem [shape: f32[64,128], index: 3, kind: input, shape index: {}]
  %s4 = inlined_call_operand.vmem [shape: f32[1,128], index: 4, kind: input, shape index: {}]
  %s5 = inlined_call_operand.vmem [shape: f32[1,128], index: 5, kind: input, shape index: {}]
  %s6 = inlined_call_operand.vmem [shape: f32[1,128], index: 6, kind: input, shape index: {}]
  %s7 = inlined_call_operand.vmem [shape: f32[128,4], index: 7, kind: input, shape index: {}]
  %s8 = inlined_call_operand.vmem [shape: f32[4,128], index: 8, kind: input, shape index: {}]
  %s9 = inlined_call_operand.hbm [shape: f32[4,128], index: 9, kind: output, shape index: {}]
  %s10 = sld [smem:[#allocation0]]
  $region46: #{tpu_custom_call.1} parent=0
    _
  %s12 = ssub.s32 1, %s10
  %s13 = scalar_select 0, %s12, %s10
  $region1: #{tpu_custom_call.1} parent=0
    #allocation2 [shape = 'u8[2048]{0}', space=vmem, size = 0x800, scoped, tag = 'output window, operand 0, single buffered']
    #allocation3 [shape = 's32[1]{0}', space=sflag, size = 0x4, scoped, tag = 'scoped memory for tpu_custom_call.1']
    %14 = vsyncpa [#allocation3], 0
    // Predicated region
    $region2: #{tpu_custom_call.1} parent=1 // pred_check
      _
    $region3: #{tpu_custom_call.1} parent=1 // pred_check_branch
      %16 = sbr.rel (0) target = $region5
    $region4: #{tpu_custom_call.1} parent=1 // pred_region
      _
    $region5: #{tpu_custom_call.1} parent=1 // pred_fallthru
      _
    // Predicated region
    $region6: #{tpu_custom_call.1} parent=1 // pred_check
      _
    $region7: #{tpu_custom_call.1} parent=1 // pred_check_branch
      %18 = sbr.rel (0) target = $region9
    $region8: #{tpu_custom_call.1} parent=1 // pred_region
      _
    $region9: #{tpu_custom_call.1} parent=1 // pred_fallthru
      _
    // Predicated region
    $region10: #{tpu_custom_call.1} parent=1 // pred_check
      _
    $region11: #{tpu_custom_call.1} parent=1 // pred_check_branch
      %20 = sbr.rel (0) target = $region13
    $region12: #{tpu_custom_call.1} parent=1 // pred_region
      _
    $region13: #{tpu_custom_call.1} parent=1 // pred_fallthru
      _
    // Predicated region
    $region14: #{tpu_custom_call.1} parent=1 // pred_check
      _
    $region15: #{tpu_custom_call.1} parent=1 // pred_check_branch
      %22 = sbr.rel (0) target = $region17
    $region16: #{tpu_custom_call.1} parent=1 // pred_region
      _
    $region17: #{tpu_custom_call.1} parent=1 // pred_fallthru
      _
    // Predicated region
    $region18: #{tpu_custom_call.1} parent=1 // pred_check
      _
    $region19: #{tpu_custom_call.1} parent=1 // pred_check_branch
      %24 = sbr.rel (0) target = $region21
    $region20: #{tpu_custom_call.1} parent=1 // pred_region
      _
    $region21: #{tpu_custom_call.1} parent=1 // pred_fallthru
      _
    // Predicated region
    $region22: #{tpu_custom_call.1} parent=1 // pred_check
      _
    $region23: #{tpu_custom_call.1} parent=1 // pred_check_branch
      %26 = sbr.rel (0) target = $region25
    $region24: #{tpu_custom_call.1} parent=1 // pred_region
      _
    $region25: #{tpu_custom_call.1} parent=1 // pred_fallthru
      _
    // Predicated region
    $region26: #{tpu_custom_call.1} parent=1 // pred_check
      _
    $region27: #{tpu_custom_call.1} parent=1 // pred_check_branch
      %28 = sbr.rel (0) target = $region29
    $region28: #{tpu_custom_call.1} parent=1 // pred_region
      _
    $region29: #{tpu_custom_call.1} parent=1 // pred_fallthru
      _
    // Predicated region
    $region30: #{tpu_custom_call.1} parent=1 // pred_check
      _
    $region31: #{tpu_custom_call.1} parent=1 // pred_check_branch
      %30 = sbr.rel (0) target = $region33
    $region32: #{tpu_custom_call.1} parent=1 // pred_region
      _
    $region33: #{tpu_custom_call.1} parent=1 // pred_fallthru
      _
    // Predicated region
    $region34: #{tpu_custom_call.1} parent=1 // pred_check
      _
    $region35: #{tpu_custom_call.1} parent=1 // pred_check_branch
      %32 = sbr.rel (0) target = $region37
    $region36: #{tpu_custom_call.1} parent=1 // pred_region
      _
    $region37: #{tpu_custom_call.1} parent=1 // pred_fallthru
      _
    %v33 = vld [vmem:[%s0] sm:$0xf]
    %v34 = vld [vmem:[%s1] sm:$0xff]
    %v35 = vld [vmem:[%s1 + $0x8] sm:$0xff]
    %v36 = vld [vmem:[%s1 + $0x10] sm:$0xff]
    %v37 = vld [vmem:[%s1 + $0x18] sm:$0xff]
    %v38 = vld [vmem:[%s1 + $0x20] sm:$0xff]
    %v39 = vld [vmem:[%s1 + $0x28] sm:$0xff]
    %v40 = vld [vmem:[%s1 + $0x30] sm:$0xff]
    %v41 = vld [vmem:[%s1 + $0x38] sm:$0xff]
    %v42 = vld [vmem:[%s1 + $0x40] sm:$0xff]
    %v43 = vld [vmem:[%s1 + $0x48] sm:$0xff]
    %v44 = vld [vmem:[%s1 + $0x50] sm:$0xff]
    %v45 = vld [vmem:[%s1 + $0x58] sm:$0xff]
    %v46 = vld [vmem:[%s1 + $0x60] sm:$0xff]
    %v47 = vld [vmem:[%s1 + $0x68] sm:$0xff]
    %v48 = vld [vmem:[%s1 + $0x70] sm:$0xff]
    %v49 = vld [vmem:[%s1 + $0x78] sm:$0xff]
    %v50 = vld [vmem:[%s2] sm:$0x1]
    %v52 = vperm.slane %v50, 0
    %54 = vmatpush.msra.mxu0 %v49
    %55 = vmatpush.msra.mxu0 %v48
    %56 = vmatpush.msra.mxu0 %v47
    %57 = vmatpush.msra.mxu0 %v46
    %58 = vmatpush.msra.mxu0 %v45
    %59 = vmatpush.msra.mxu0 %v44
    %60 = vmatpush.msra.mxu0 %v43
    %61 = vmatpush.msra.mxu0 %v42
    %62 = vmatpush.msra.mxu0 %v41
    %63 = vmatpush.msra.mxu0 %v40
    %64 = vmatpush.msra.mxu0 %v39
    %65 = vmatpush.msra.mxu0 %v38
    %66 = vmatpush.msra.mxu0 %v37
    %67 = vmatpush.msra.mxu0 %v36
    %68 = vmatpush.msra.mxu0 %v35
    %69 = vmatpush.msra.mxu0 %v34
    %70 = vmatmul.f32.gmra.mxu0 %v33
    %v71 = vpop.f32.mrf.mxu0
    %v72 = vadd.f32 %v52, %v71
    %73 = vdwg.mxu0
    %v74 = vmax.f32 %v72, 0.0
    %v75 = vld [vmem:[%s3] sm:$0xff]
    %v76 = vld [vmem:[%s3 + $0x8] sm:$0xff]
    %v77 = vld [vmem:[%s3 + $0x10] sm:$0xff]
    %v78 = vld [vmem:[%s3 + $0x18] sm:$0xff]
    %v79 = vld [vmem:[%s3 + $0x20] sm:$0xff]
    %v80 = vld [vmem:[%s3 + $0x28] sm:$0xff]
    %v81 = vld [vmem:[%s3 + $0x30] sm:$0xff]
    %v82 = vld [vmem:[%s3 + $0x38] sm:$0xff]
    %v83 = vld [vmem:[%s4] sm:$0x1]
    %v85 = vperm.slane %v83, 0
    %vm87 = vcmask 523264
    %v89 = vsel %vm87, %v74, 0
    %91 = vmatpush.msra.mxu0 0.0
    %92 = vmatpush.msra.mxu0 0.0
    %93 = vmatpush.msra.mxu0 0.0
    %94 = vmatpush.msra.mxu0 0.0
    %95 = vmatpush.msra.mxu0 0.0
    %96 = vmatpush.msra.mxu0 0.0
    %97 = vmatpush.msra.mxu0 0.0
    %98 = vmatpush.msra.mxu0 0.0
    %99 = vmatpush.msra.mxu0 %v82
    %100 = vmatpush.msra.mxu0 %v81
    %101 = vmatpush.msra.mxu0 %v80
    %102 = vmatpush.msra.mxu0 %v79
    %103 = vmatpush.msra.mxu0 %v78
    %104 = vmatpush.msra.mxu0 %v77
    %105 = vmatpush.msra.mxu0 %v76
    %106 = vmatpush.msra.mxu0 %v75
    %107 = vmatmul.f32.gmra.mxu0 %v89
    %v108 = vpop.f32.mrf.mxu0
    %v109 = vadd.f32 %v85, %v108
    %110 = vdwg.mxu0
    %v111 = vld [vmem:[%s7] sm:$0xff]
    %v112 = vld [vmem:[%s7 + $0x8] sm:$0xff]
    %v113 = vld [vmem:[%s7 + $0x10] sm:$0xff]
    %v114 = vld [vmem:[%s7 + $0x18] sm:$0xff]
    %v115 = vld [vmem:[%s7 + $0x20] sm:$0xff]
    %v116 = vld [vmem:[%s7 + $0x28] sm:$0xff]
    %v117 = vld [vmem:[%s7 + $0x30] sm:$0xff]
    %v118 = vld [vmem:[%s7 + $0x38] sm:$0xff]
    %v119 = vld [vmem:[%s7 + $0x40] sm:$0xff]
    %v120 = vld [vmem:[%s7 + $0x48] sm:$0xff]
    %v121 = vld [vmem:[%s7 + $0x50] sm:$0xff]
    %v122 = vld [vmem:[%s7 + $0x58] sm:$0xff]
    %v123 = vld [vmem:[%s7 + $0x60] sm:$0xff]
    %v124 = vld [vmem:[%s7 + $0x68] sm:$0xff]
    %v125 = vld [vmem:[%s7 + $0x70] sm:$0xff]
    %v126 = vld [vmem:[%s7 + $0x78] sm:$0xff]
    %127 = vmatpush.msra.mxu0 %v126
    %128 = vmatpush.msra.mxu0 %v125
    %129 = vmatpush.msra.mxu0 %v124
    %130 = vmatpush.msra.mxu0 %v123
    %131 = vmatpush.msra.mxu0 %v122
    %132 = vmatpush.msra.mxu0 %v121
    %133 = vmatpush.msra.mxu0 %v120
    %134 = vmatpush.msra.mxu0 %v119
    %135 = vmatpush.msra.mxu0 %v118
    %136 = vmatpush.msra.mxu0 %v117
    %137 = vmatpush.msra.mxu0 %v116
    %138 = vmatpush.msra.mxu0 %v115
    %139 = vmatpush.msra.mxu0 %v114
    %140 = vmatpush.msra.mxu0 %v113
    %141 = vmatpush.msra.mxu0 %v112
    %142 = vmatpush.msra.mxu0 %v111
    %143 = vmatmul.f32.gmra.mxu0 %v109
    %v144 = vpop.f32.mrf.mxu0
    %v145 = vadd.f32 0.0, %v144
    %146 = vdwg.mxu0
    %v147 = vld [vmem:[%s8] sm:$0xf]
    %vm148 = vcmask 31744
    %v150 = vsel %vm148, %v145, 0
    %vm152 = vcmask 1043456
    %v154 = vsel %vm152, %v147, 0
    %156 = vmatpush.msra.mxu0 0.0
    %157 = vmatpush.msra.mxu0 0.0
    %158 = vmatpush.msra.mxu0 0.0
    %159 = vmatpush.msra.mxu0 0.0
    %160 = vmatpush.msra.mxu0 0.0
    %161 = vmatpush.msra.mxu0 0.0
    %162 = vmatpush.msra.mxu0 0.0
    %163 = vmatpush.msra.mxu0 0.0
    %164 = vmatpush.msra.mxu0 0.0
    %165 = vmatpush.msra.mxu0 0.0
    %166 = vmatpush.msra.mxu0 0.0
    %167 = vmatpush.msra.mxu0 0.0
    %168 = vmatpush.msra.mxu0 0.0
    %169 = vmatpush.msra.mxu0 0.0
    %170 = vmatpush.msra.mxu0 0.0
    %171 = vmatpush.msra.mxu0 %v154
    %172 = vmatmul.f32.gmra.mxu0 %v150
    %v173 = vpop.f32.mrf.mxu0
    %v174 = vadd.f32 0.0, %v173
    %175 = vdwg.mxu0
    %v176 = vsub.f32 %v109, %v174
    %v177 = vmul.f32 %v176, %v176
    %178 = vmatpush.msra.mxu0 %v126
    %179 = vmatpush.msra.mxu0 %v125
    %180 = vmatpush.msra.mxu0 %v124
    %181 = vmatpush.msra.mxu0 %v123
    %182 = vmatpush.msra.mxu0 %v122
    %183 = vmatpush.msra.mxu0 %v121
    %184 = vmatpush.msra.mxu0 %v120
    %185 = vmatpush.msra.mxu0 %v119
    %186 = vmatpush.msra.mxu0 %v118
    %187 = vmatpush.msra.mxu0 %v117
    %188 = vmatpush.msra.mxu0 %v116
    %189 = vmatpush.msra.mxu0 %v115
    %190 = vmatpush.msra.mxu0 %v114
    %191 = vmatpush.msra.mxu0 %v113
    %192 = vmatpush.msra.mxu0 %v112
    %193 = vmatpush.msra.mxu0 %v111
    %194 = vmatmul.f32.gmra.mxu0 %v177
    %v195 = vpop.f32.mrf.mxu0
    %v196 = vadd.f32 0.0, %v195
    %197 = vdwg.mxu0
    %v199 = vsel %vm148, %v196, 0
    %201 = vmatpush.msra.mxu0 0.0
    %202 = vmatpush.msra.mxu0 0.0
    %203 = vmatpush.msra.mxu0 0.0
    %204 = vmatpush.msra.mxu0 0.0
    %205 = vmatpush.msra.mxu0 0.0
    %206 = vmatpush.msra.mxu0 0.0
    %207 = vmatpush.msra.mxu0 0.0
    %208 = vmatpush.msra.mxu0 0.0
    %209 = vmatpush.msra.mxu0 0.0
    %210 = vmatpush.msra.mxu0 0.0
    %211 = vmatpush.msra.mxu0 0.0
    %212 = vmatpush.msra.mxu0 0.0
    %213 = vmatpush.msra.mxu0 0.0
    %214 = vmatpush.msra.mxu0 0.0
    %215 = vmatpush.msra.mxu0 0.0
    %216 = vmatpush.msra.mxu0 %v154
    %217 = vmatmul.f32.gmra.mxu0 %v199
    %v218 = vpop.f32.mrf.mxu0
    %v219 = vadd.f32 1e-05, %v218
    %220 = vdwg.mxu0
    %v221 = vrsqrt.pop %v219
    %v222 = vmul.f32 %v221, %v219
    %v223 = vmul.f32 %v222, %v221
    %v224 = vmul.f32 0.5, %v223
    %v225 = vsub.f32 1.5, %v224
    %v226 = vmul.f32 %v221, %v225
    %vm227 = vweird.f32 %v219
    %vm228 = vweird.f32 %v221
    %vm229 = vmor %vm227, %vm228
    %v230 = vsel %vm229, %v221, %v226
    %v231 = vmul.f32 %v176, %v230
    %v232 = vld [vmem:[%s5] sm:$0x1]
    %v234 = vperm.slane %v232, 0
    %v236 = vmul.f32 %v231, %v234
    %v237 = vld [vmem:[%s6] sm:$0x1]
    %v239 = vperm.slane %v237, 0
    %v241 = vadd.f32 %v236, %v239
    %v242 = vadd.f32 %v33, %v241
    %243 = vst [vmem:[#allocation2] sm:$0xf] %v242
    // Predicated region
    $region38: #{tpu_custom_call.1} parent=1 // pred_check
      _
    $region39: #{tpu_custom_call.1} parent=1 // pred_check_branch
      %245 = sbr.rel (0) target = $region41
    $region40: #{tpu_custom_call.1} parent=1 // pred_region
      %247 = vsyncadd [#allocation3], 0
      %s249 = sshll.u32 [#allocation2], 4
      %s250 = int_to_ptr.vmem [resolvable:$true] %s249
      %s251 = sshll.u32 %s9, 4
      %s252 = int_to_ptr.hbm [resolvable:$true] %s251
      %254 = dma.vmem_to_hbm [thread:$0]  %s250, 64, %s252, [#allocation3]
    $region41: #{tpu_custom_call.1} parent=1 // pred_fallthru
      _
    // Predicated region
    $region42: #{tpu_custom_call.1} parent=1 // pred_check
      _
    $region43: #{tpu_custom_call.1} parent=1 // pred_check_branch
      %256 = sbr.rel (0) target = $region45
    $region44: #{tpu_custom_call.1} parent=1 // pred_region
      %258 = dma.done [#allocation3], 64
    $region45: #{tpu_custom_call.1} parent=1 // pred_fallthru
      _
    %259 = vsyncpa [#allocation3], 1

</llo_original>
